<compile_context>
chip_gen: v6e
topology: v6e:2x2x1
jax: 0.10.0
libtpu: 0.0.40
codegen_flags: <defaults>
</compile_context>

<pallas_src>
import functools

import jax
import jax.numpy as jnp
from jax.experimental import pallas as pl
from jax.experimental.pallas import tpu as pltpu


# Scoped-VMEM limit: well above the 16-32 MiB defaults, comfortably below
# v7x's 64 MiB physical VMEM (v5e/v6e have 128 MiB physical).
_VMEM_LIMIT_BYTES = 48 * 1024 * 1024


# ----------------------------------------------------------------------------
# Batch tiling: explicit VMEM budget instead of a fixed max tile
# ----------------------------------------------------------------------------
def _batch_tile(batch, seq, embed, ftot, vmem_budget=32 * 1024 * 1024):
    """Largest batch tile whose working set fits `vmem_budget`.

    Per batch row (bytes): double-buffered bf16 embedding tile (2x), one
    shifted bf16 copy, and the f32 fused-conv accumulator.  The tile divides
    the batch; for batch >= 16 it is capped at batch // 2 so the "parallel"
    grid axis has >= 2 steps and a 2-TensorCore chip (v7x) never idles a core.
    """
    per_row = 3 * seq * embed * 2 + seq * ftot * 4
    cap = max(8, int(vmem_budget // max(per_row, 1)))
    if batch >= 16:
        cap = min(cap, batch // 2)
    if batch <= cap:
        return batch
    cap = min(cap, batch)
    # Largest 8-aligned divisor of the batch not exceeding the cap.
    for tb in range(cap - cap % 8, 7, -8):
        if batch % tb == 0:
            return tb
    # TODO(synk): pad odd/prime batches (or use a cdiv grid with masked
    # writes) instead of falling back to small/unaligned tiles.
    for tb in range(cap, 0, -1):
        if batch % tb == 0:
            return tb
    return batch


# ----------------------------------------------------------------------------
# Fused kernel: convs + max-pool + bias/ReLU + concat + 2x(Linear + softmax)
# ----------------------------------------------------------------------------
def mycnn_fused_kernel(emb_ref, wsh_ref, bconv_ref, wh_ref, bh_ref, o_ref, *,
                       filter_sizes, num_filters, num_classes0):
    fs = filter_sizes
    kmax = max(fs)
    F = num_filters
    ftot = F * len(fs)

    emb = emb_ref[...]                       # (TB, S, E) bf16
    TB, S, E = emb.shape
    M = TB * S

    # Flatten batch into the matmul M dimension (fills the MXU) and append
    # kmax-1 zero rows so every shifted view below has a static (M, E) shape.
    x = emb.reshape(M, E)
    if kmax > 1:
        x = jnp.concatenate([x, jnp.zeros((kmax - 1, E), emb.dtype)], axis=0)

    # kmax shifted E-wide matmuls against the branch-fused per-shift weights
    # Wsh[j] (E, Ftot): one f32 accumulator, one wide-N MXU stream, no slabs.
    acc = jnp.zeros((M, ftot), jnp.float32)
    for j in range(kmax):
        acc = acc + jnp.dot(x[j:j + M, :], wsh_ref[j],
                            preferred_element_type=jnp.float32)
    acc = acc.reshape(TB, S, ftot)

    # For a branch with filter size k, positions l > S - k are invalid (they
    # mix rows of the next batch element / zero padding): mask before pooling.
    l_idx = jax.lax.broadcasted_iota(jnp.int32, (S, ftot), 0)
    lim = jnp.concatenate(
        [jnp.full((S, F), S - k, jnp.int32) for k in fs], axis=1)
    valid = l_idx <= lim
    pooled = jnp.max(jnp.where(valid[None], acc, -jnp.inf), axis=1)  # (TB, Ftot)

    # Bias + ReLU AFTER the pool (exact: bias constant over L, ReLU monotone).
    feat = jnp.maximum(pooled + bconv_ref[...], 0.0).astype(jnp.bfloat16)

    # Both Linear heads fused into one (Ftot, C0+C1) matmul; exact softmaxes.
    logits = jnp.dot(feat, wh_ref[...],
                     preferred_element_type=jnp.float32) + bh_ref[...]

    def _softmax(z):
        z = z - jnp.max(z, axis=1, keepdims=True)
        e = jnp.exp(z)
        return e / jnp.sum(e, axis=1, keepdims=True)   # exact reciprocal

    c0 = num_classes0
    o_ref[...] = jnp.concatenate(
        [_softmax(logits[:, :c0]), _softmax(logits[:, c0:])], axis=1)


# ----------------------------------------------------------------------------
# Full forward pass (one pallas_call)
# ----------------------------------------------------------------------------
def mycnn_forward(x_ids, params, filter_sizes):
    fs = tuple(filter_sizes)
    kmax = max(fs)

    # Cast the TABLE to bf16 before the gather: the gather writes bf16 to HBM
    # directly (no f32 round-trip + convert pass).
    emb = jnp.take(params["embedding"].astype(jnp.bfloat16), x_ids, axis=0)
    B, S, E = emb.shape

    F = params[f"conv{fs[0]}_w"].shape[-1]
    ftot = F * len(fs)

    # Branch-fused per-shift conv weights: Wsh[j][:, block_k] = w_k[j] if
    # j < k else 0.  Shape (kmax, E, Ftot), bf16.
    cols = []
    for k in fs:
        w = params[f"conv{k}_w"].astype(jnp.bfloat16)        # (k, E, F)
        if k < kmax:
            w = jnp.concatenate(
                [w, jnp.zeros((kmax - k, E, F), jnp.bfloat16)], axis=0)
        cols.append(w)
    wsh = jnp.concatenate(cols, axis=-1)                     # (kmax, E, Ftot)
    bconv = jnp.concatenate(
        [params[f"conv{k}_b"] for k in fs], axis=-1).astype(jnp.float32)

    # Fused heads.
    wh = jnp.concatenate(
        [params["fc0_w"], params["fc1_w"]], axis=-1).astype(jnp.bfloat16)
    bh = jnp.concatenate(
        [params["fc0_b"], params["fc1_b"]], axis=-1).astype(jnp.float32)
    c0 = params["fc0_w"].shape[-1]
    c1 = params["fc1_w"].shape[-1]
    C = c0 + c1

    TB = _batch_tile(B, S, E, ftot)
    grid = (B // TB,)

    probs = pl.pallas_call(
        functools.partial(mycnn_fused_kernel, filter_sizes=fs,
                          num_filters=F, num_classes0=c0),
        out_shape=jax.ShapeDtypeStruct((B, C), jnp.float32),
        grid_spec=pltpu.PrefetchScalarGridSpec(
            num_scalar_prefetch=0,
            grid=grid,
            in_specs=[
                pl.BlockSpec((TB, S, E), lambda i: (i, 0, 0)),       # emb
                pl.BlockSpec((kmax, E, ftot), lambda i: (0, 0, 0)),  # Wsh
                pl.BlockSpec((1, ftot), lambda i: (0, 0)),           # conv bias
                pl.BlockSpec((ftot, C), lambda i: (0, 0)),           # fused heads W
                pl.BlockSpec((1, C), lambda i: (0, 0)),              # fused heads b
            ],
            out_specs=pl.BlockSpec((TB, C), lambda i: (i, 0))),
        compiler_params=pltpu.CompilerParams(
            dimension_semantics=("parallel",),
            vmem_limit_bytes=_VMEM_LIMIT_BYTES),
    )(emb, wsh, bconv, wh, bh)

    return probs[:, :c0], probs[:, c0:]


# ----------------------------------------------------------------------------
# Pure-JAX reference (f32) for correctness checking
# ----------------------------------------------------------------------------
def mycnn_reference(x_ids, params, filter_sizes):
    emb = jnp.take(params["embedding"], x_ids, axis=0)        # (B, S, E) f32
    B, S, E = emb.shape
    feats = []
    for k in filter_sizes:
        w = params[f"conv{k}_w"]                              # (k, E, F)
        bias = params[f"conv{k}_b"]                           # (1, F)
        L = S - k + 1
        acc = jnp.zeros((B, L, w.shape[-1]), jnp.float32)
        for j in range(k):
            acc = acc + jnp.einsum("ble,ef->blf", emb[:, j:j + L, :], w[j])
        acc = jnp.maximum(acc + bias, 0.0)
        feats.append(jnp.max(acc, axis=1))
    feat = jnp.concatenate(feats, axis=1)

    def head(wf, bf):
        return jax.nn.softmax(feat @ wf + bf, axis=1)

    return (head(params["fc0_w"], params["fc0_b"]),
            head(params["fc1_w"], params["fc1_b"]))


# ----------------------------------------------------------------------------
# Deterministic parameter init + example run
# ----------------------------------------------------------------------------
def init_params(key, n_vocab, embed, num_filters, filter_sizes,
                num_classes0, num_classes1):
    keys = jax.random.split(key, 4 + 2 * len(filter_sizes))
    params = {}
    params["embedding"] = jax.random.normal(
        keys[0], (n_vocab, embed), jnp.float32) * 0.1
    for i, k in enumerate(filter_sizes):
        params[f"conv{k}_w"] = jax.random.normal(
            keys[1 + 2 * i], (k, embed, num_filters), jnp.float32) * 0.1
        params[f"conv{k}_b"] = jax.random.normal(
            keys[2 + 2 * i], (1, num_filters), jnp.float32) * 0.1
    ftot = num_filters * len(filter_sizes)
    params["fc0_w"] = jax.random.normal(
        keys[-4], (ftot, num_classes0), jnp.float32) * 0.1
    params["fc0_b"] = jax.random.normal(
        keys[-3], (1, num_classes0), jnp.float32) * 0.1
    params["fc1_w"] = jax.random.normal(
        keys[-2], (ftot, num_classes1), jnp.float32) * 0.1
    params["fc1_b"] = jax.random.normal(
        keys[-1], (1, num_classes1), jnp.float32) * 0.1
    return params


if __name__ == "__main__":
    # Small config consistent with the module's forward pass.
    n_vocab = 100
    embed = 32
    num_filters = 8
    filter_sizes = (2, 3, 4)
    num_classes0 = 4
    num_classes1 = 6
    batch = 2
    seq_len = 16

    key = jax.random.PRNGKey(0)
    k_param, k_data = jax.random.split(key)
    params = init_params(k_param, n_vocab, embed, num_filters, filter_sizes,
                         num_classes0, num_classes1)
    x_ids = jax.random.randint(k_data, (batch, seq_len), 0, n_vocab,
                               dtype=jnp.int32)

    forward = jax.jit(functools.partial(mycnn_forward,
                                        filter_sizes=filter_sizes))
    probs0, probs1 = forward(x_ids, params)
    jax.block_until_ready((probs0, probs1))

    assert probs0.shape == (batch, num_classes0)
    assert probs1.shape == (batch, num_classes1)

    # Exact softmax -> rows sum to 1 within f32 rounding.
    assert jnp.allclose(jnp.sum(probs0, axis=1), 1.0, atol=1e-3)
    assert jnp.allclose(jnp.sum(probs1, axis=1), 1.0, atol=1e-3)

    # Match the pure-JAX f32 reference (bf16 matmuls -> modest tolerance).
    ref0, ref1 = mycnn_reference(x_ids, params, filter_sizes)
    assert jnp.allclose(probs0, ref0, atol=5e-3)
    assert jnp.allclose(probs1, ref1, atol=5e-3)

    print("KERNEL_OK")
</pallas_src>

<mosaic_0001>
module attributes {stable_mosaic.version = 11 : i64} {
  func.func @mycnn_fused_kernel(%arg0: i32, %arg1: memref<2x16x32xbf16, #tpu.memory_space<vmem>>, %arg2: memref<4x32x24xbf16, #tpu.memory_space<vmem>>, %arg3: memref<1x24xf32, #tpu.memory_space<vmem>>, %arg4: memref<24x10xbf16, #tpu.memory_space<vmem>>, %arg5: memref<1x10xf32, #tpu.memory_space<vmem>>, %arg6: memref<2x10xf32, #tpu.memory_space<vmem>>) attributes {dimension_semantics = [#tpu.dimension_semantics<parallel>], iteration_bounds = array<i64: 1>, scalar_prefetch = 0 : i64, scratch_operands = 0 : i64, tpu.core_type = #tpu.core_type<tc>, window_params = [{transform_indices = @transform_0, window_bounds = array<i64: 2, 16, 32>}, {pipeline_mode = #tpu.pipeline_mode<synchronous>, transform_indices = @transform_1, window_bounds = array<i64: 4, 32, 24>}, {pipeline_mode = #tpu.pipeline_mode<synchronous>, transform_indices = @transform_2, window_bounds = array<i64: 1, 24>}, {pipeline_mode = #tpu.pipeline_mode<synchronous>, transform_indices = @transform_3, window_bounds = array<i64: 24, 10>}, {pipeline_mode = #tpu.pipeline_mode<synchronous>, transform_indices = @transform_4, window_bounds = array<i64: 1, 10>}, {transform_indices = @transform_5, window_bounds = array<i64: 2, 10>}]} {
    %c0 = arith.constant 0 : index
    %c0_0 = arith.constant 0 : index
    %c0_1 = arith.constant 0 : index
    %0 = vector.load %arg1[%c0, %c0_0, %c0_1] : memref<2x16x32xbf16, #tpu.memory_space<vmem>>, vector<2x16x32xbf16>
    %1 = vector.shape_cast %0 : vector<2x16x32xbf16> to vector<32x32xbf16>
    %cst = arith.constant 0.000000e+00 : bf16
    %2 = vector.broadcast %cst : bf16 to vector<3x32xbf16>
    %3 = tpu.concatenate %1, %2 in 0 : vector<32x32xbf16>, vector<3x32xbf16> -> vector<35x32xbf16>
    %cst_2 = arith.constant 0.000000e+00 : f32
    %4 = vector.broadcast %cst_2 : f32 to vector<32x24xf32>
    %5 = vector.extract_strided_slice %3 {offsets = [0, 0], sizes = [32, 32], strides = [1, 1]} : vector<35x32xbf16> to vector<32x32xbf16>
    %c0_3 = arith.constant 0 : index
    %c0_4 = arith.constant 0 : index
    %c0_5 = arith.constant 0 : index
    %6 = vector.load %arg2[%c0_3, %c0_4, %c0_5] : memref<4x32x24xbf16, #tpu.memory_space<vmem>>, vector<1x32x24xbf16>
    %7 = vector.shape_cast %6 : vector<1x32x24xbf16> to vector<32x24xbf16>
    %cst_6 = arith.constant dense<0.000000e+00> : vector<32x24xf32>
    %8 = tpu.matmul %5, %7, %cst_6 {dimension_numbers = #tpu.dot_dimension_numbers<[1], [0], [0], [1], [0, 0, 1, 1], [], []>} : vector<32x32xbf16>, vector<32x24xbf16>, vector<32x24xf32> -> vector<32x24xf32>
    %9 = arith.addf %4, %8 : vector<32x24xf32>
    %10 = vector.extract_strided_slice %3 {offsets = [1, 0], sizes = [32, 32], strides = [1, 1]} : vector<35x32xbf16> to vector<32x32xbf16>
    %c1 = arith.constant 1 : index
    %c0_7 = arith.constant 0 : index
    %c0_8 = arith.constant 0 : index
    %11 = vector.load %arg2[%c1, %c0_7, %c0_8] : memref<4x32x24xbf16, #tpu.memory_space<vmem>>, vector<1x32x24xbf16>
    %12 = vector.shape_cast %11 : vector<1x32x24xbf16> to vector<32x24xbf16>
    %cst_9 = arith.constant dense<0.000000e+00> : vector<32x24xf32>
    %13 = tpu.matmul %10, %12, %cst_9 {dimension_numbers = #tpu.dot_dimension_numbers<[1], [0], [0], [1], [0, 0, 1, 1], [], []>} : vector<32x32xbf16>, vector<32x24xbf16>, vector<32x24xf32> -> vector<32x24xf32>
    %14 = arith.addf %9, %13 : vector<32x24xf32>
    %15 = vector.extract_strided_slice %3 {offsets = [2, 0], sizes = [32, 32], strides = [1, 1]} : vector<35x32xbf16> to vector<32x32xbf16>
    %c2 = arith.constant 2 : index
    %c0_10 = arith.constant 0 : index
    %c0_11 = arith.constant 0 : index
    %16 = vector.load %arg2[%c2, %c0_10, %c0_11] : memref<4x32x24xbf16, #tpu.memory_space<vmem>>, vector<1x32x24xbf16>
    %17 = vector.shape_cast %16 : vector<1x32x24xbf16> to vector<32x24xbf16>
    %cst_12 = arith.constant dense<0.000000e+00> : vector<32x24xf32>
    %18 = tpu.matmul %15, %17, %cst_12 {dimension_numbers = #tpu.dot_dimension_numbers<[1], [0], [0], [1], [0, 0, 1, 1], [], []>} : vector<32x32xbf16>, vector<32x24xbf16>, vector<32x24xf32> -> vector<32x24xf32>
    %19 = arith.addf %14, %18 : vector<32x24xf32>
    %20 = vector.extract_strided_slice %3 {offsets = [3, 0], sizes = [32, 32], strides = [1, 1]} : vector<35x32xbf16> to vector<32x32xbf16>
    %c3 = arith.constant 3 : index
    %c0_13 = arith.constant 0 : index
    %c0_14 = arith.constant 0 : index
    %21 = vector.load %arg2[%c3, %c0_13, %c0_14] : memref<4x32x24xbf16, #tpu.memory_space<vmem>>, vector<1x32x24xbf16>
    %22 = vector.shape_cast %21 : vector<1x32x24xbf16> to vector<32x24xbf16>
    %cst_15 = arith.constant dense<0.000000e+00> : vector<32x24xf32>
    %23 = tpu.matmul %20, %22, %cst_15 {dimension_numbers = #tpu.dot_dimension_numbers<[1], [0], [0], [1], [0, 0, 1, 1], [], []>} : vector<32x32xbf16>, vector<32x24xbf16>, vector<32x24xf32> -> vector<32x24xf32>
    %24 = arith.addf %19, %23 : vector<32x24xf32>
    %25 = vector.shape_cast %24 : vector<32x24xf32> to vector<2x16x24xf32>
    %26 = tpu.iota {dimensions = array<i32: 0>} : vector<16x24xi32>
    %c14_i32 = arith.constant 14 : i32
    %27 = vector.broadcast %c14_i32 : i32 to vector<16x8xi32>
    %c13_i32 = arith.constant 13 : i32
    %28 = vector.broadcast %c13_i32 : i32 to vector<16x8xi32>
    %c12_i32 = arith.constant 12 : i32
    %29 = vector.broadcast %c12_i32 : i32 to vector<16x8xi32>
    %30 = tpu.concatenate %27, %28, %29 in 1 : vector<16x8xi32>, vector<16x8xi32>, vector<16x8xi32> -> vector<16x24xi32>
    %31 = arith.cmpi sle, %26, %30 : vector<16x24xi32>
    %32 = vector.shape_cast %31 : vector<16x24xi1> to vector<1x16x24xi1>
    %cst_16 = arith.constant 0xFF800000 : f32
    %33 = vector.shape_cast %32 : vector<1x16x24xi1> to vector<1x16x24xi1>
    %34 = vector.broadcast %33 : vector<1x16x24xi1> to vector<2x16x24xi1>
    %35 = vector.broadcast %cst_16 : f32 to vector<2x16x24xf32>
    %36 = arith.select %34, %25, %35 : vector<2x16x24xi1>, vector<2x16x24xf32>
    %cst_17 = arith.constant dense<0xFF800000> : vector<2x24xf32>
    %37 = vector.multi_reduction <maximumf>, %36, %cst_17 [1] : vector<2x16x24xf32> to vector<2x24xf32>
    %c0_18 = arith.constant 0 : index
    %c0_19 = arith.constant 0 : index
    %38 = vector.load %arg3[%c0_18, %c0_19] : memref<1x24xf32, #tpu.memory_space<vmem>>, vector<1x24xf32>
    %39 = vector.broadcast %38 : vector<1x24xf32> to vector<2x24xf32>
    %40 = arith.addf %37, %39 : vector<2x24xf32>
    %cst_20 = arith.constant 0.000000e+00 : f32
    %41 = vector.broadcast %cst_20 : f32 to vector<2x24xf32>
    %42 = arith.maximumf %40, %41 : vector<2x24xf32>
    %43 = arith.truncf %42 : vector<2x24xf32> to vector<2x24xbf16>
    %c0_21 = arith.constant 0 : index
    %c0_22 = arith.constant 0 : index
    %44 = vector.load %arg4[%c0_21, %c0_22] : memref<24x10xbf16, #tpu.memory_space<vmem>>, vector<24x10xbf16>
    %cst_23 = arith.constant dense<0.000000e+00> : vector<2x10xf32>
    %45 = tpu.matmul %43, %44, %cst_23 {dimension_numbers = #tpu.dot_dimension_numbers<[1], [0], [0], [1], [0, 0, 1, 1], [], []>} : vector<2x24xbf16>, vector<24x10xbf16>, vector<2x10xf32> -> vector<2x10xf32>
    %c0_24 = arith.constant 0 : index
    %c0_25 = arith.constant 0 : index
    %46 = vector.load %arg5[%c0_24, %c0_25] : memref<1x10xf32, #tpu.memory_space<vmem>>, vector<1x10xf32>
    %47 = vector.broadcast %46 : vector<1x10xf32> to vector<2x10xf32>
    %48 = arith.addf %45, %47 : vector<2x10xf32>
    %49 = vector.extract_strided_slice %48 {offsets = [0, 0], sizes = [2, 4], strides = [1, 1]} : vector<2x10xf32> to vector<2x4xf32>
    %cst_26 = arith.constant dense<0xFF800000> : vector<2xf32>
    %50 = vector.multi_reduction <maximumf>, %49, %cst_26 [1] : vector<2x4xf32> to vector<2xf32>
    %51 = vector.shape_cast %50 : vector<2xf32> to vector<2x1xf32>
    %52 = vector.broadcast %51 : vector<2x1xf32> to vector<2x4xf32>
    %53 = arith.subf %49, %52 : vector<2x4xf32>
    %54 = math.exp %53 : vector<2x4xf32>
    %cst_27 = arith.constant dense<0.000000e+00> : vector<2xf32>
    %55 = vector.multi_reduction <add>, %54, %cst_27 [1] : vector<2x4xf32> to vector<2xf32>
    %56 = vector.shape_cast %55 : vector<2xf32> to vector<2x1xf32>
    %57 = vector.broadcast %56 : vector<2x1xf32> to vector<2x4xf32>
    %58 = arith.divf %54, %57 : vector<2x4xf32>
    %59 = vector.extract_strided_slice %48 {offsets = [0, 4], sizes = [2, 6], strides = [1, 1]} : vector<2x10xf32> to vector<2x6xf32>
    %cst_28 = arith.constant dense<0xFF800000> : vector<2xf32>
    %60 = vector.multi_reduction <maximumf>, %59, %cst_28 [1] : vector<2x6xf32> to vector<2xf32>
    %61 = vector.shape_cast %60 : vector<2xf32> to vector<2x1xf32>
    %62 = vector.broadcast %61 : vector<2x1xf32> to vector<2x6xf32>
    %63 = arith.subf %59, %62 : vector<2x6xf32>
    %64 = math.exp %63 : vector<2x6xf32>
    %cst_29 = arith.constant dense<0.000000e+00> : vector<2xf32>
    %65 = vector.multi_reduction <add>, %64, %cst_29 [1] : vector<2x6xf32> to vector<2xf32>
    %66 = vector.shape_cast %65 : vector<2xf32> to vector<2x1xf32>
    %67 = vector.broadcast %66 : vector<2x1xf32> to vector<2x6xf32>
    %68 = arith.divf %64, %67 : vector<2x6xf32>
    %69 = tpu.concatenate %58, %68 in 1 : vector<2x4xf32>, vector<2x6xf32> -> vector<2x10xf32>
    %c0_30 = arith.constant 0 : index
    %c0_31 = arith.constant 0 : index
    %70 = vector.load %arg6[%c0_30, %c0_31] : memref<2x10xf32, #tpu.memory_space<vmem>>, vector<2x10xf32>
    tpu.vector_store %arg6[%c0_30, %c0_31], %69 {strides = array<i32>} : memref<2x10xf32, #tpu.memory_space<vmem>>, vector<2x10xf32>,
    return
  }
  func.func @transform_0(%arg0: i32) -> (i32, i32, i32) {
    %c0_i32 = arith.constant 0 : i32
    %c0_i32_0 = arith.constant 0 : i32
    %c0_i32_1 = arith.constant 0 : i32
    return %arg0, %c0_i32, %c0_i32_0 : i32, i32, i32
  }
  func.func @transform_1(%arg0: i32) -> (i32, i32, i32) {
    %c0_i32 = arith.constant 0 : i32
    %c0_i32_0 = arith.constant 0 : i32
    %c0_i32_1 = arith.constant 0 : i32
    %c0_i32_2 = arith.constant 0 : i32
    return %c0_i32, %c0_i32_0, %c0_i32_1 : i32, i32, i32
  }
  func.func @transform_2(%arg0: i32) -> (i32, i32) {
    %c0_i32 = arith.constant 0 : i32
    %c0_i32_0 = arith.constant 0 : i32
    %c0_i32_1 = arith.constant 0 : i32
    return %c0_i32, %c0_i32_0 : i32, i32
  }
  func.func @transform_3(%arg0: i32) -> (i32, i32) {
    %c0_i32 = arith.constant 0 : i32
    %c0_i32_0 = arith.constant 0 : i32
    %c0_i32_1 = arith.constant 0 : i32
    return %c0_i32, %c0_i32_0 : i32, i32
  }
  func.func @transform_4(%arg0: i32) -> (i32, i32) {
    %c0_i32 = arith.constant 0 : i32
    %c0_i32_0 = arith.constant 0 : i32
    %c0_i32_1 = arith.constant 0 : i32
    return %c0_i32, %c0_i32_0 : i32, i32
  }
  func.func @transform_5(%arg0: i32) -> (i32, i32) {
    %c0_i32 = arith.constant 0 : i32
    %c0_i32_0 = arith.constant 0 : i32
    return %arg0, %c0_i32 : i32, i32
  }
}

</mosaic_0001>

<llo_original>
// kernel: mycnn_forward.1
$region0: #{mycnn_forward.1}
  #allocation0 [shape = 'u32[]', space=smem, size = 0x4, offset = 0x4, fixed_abs, tag = 'smem constant byte address 0x4 - core index']
  #allocation1 [shape = 'u32[144,128]{1,0:T(1,128)}', space=vmem, size = 0x12000, scoped, tag = 'internal scratch']
  %s0 = inlined_call_operand.vmem [shape: bf16[2,16,32], index: 0, kind: input, shape index: {}]
  %s1 = inlined_call_operand.vmem [shape: bf16[4,32,24], index: 1, kind: input, shape index: {}]
  %s2 = inlined_call_operand.vmem [shape: f32[1,24], index: 2, kind: input, shape index: {}]
  %s3 = inlined_call_operand.vmem [shape: bf16[24,10], index: 3, kind: input, shape index: {}]
  %s4 = inlined_call_operand.vmem [shape: f32[1,10], index: 4, kind: input, shape index: {}]
  %s5 = inlined_call_operand.vmem [shape: f32[2,10], index: 5, kind: output, shape index: {}]
  %s6 = sld [smem:[#allocation0]]
  $region30: #{mycnn_forward.1} parent=0
    _
  %s8 = ssub.s32 1, %s6
  %s9 = scalar_select 0, %s8, %s6
  // Predicated region
  $region2: #{mycnn_forward.1} parent=0 // pred_check
    _
  $region3: #{mycnn_forward.1} parent=0 // pred_check_branch
    %11 = sbr.rel (0) target = $region5
  $region4: #{mycnn_forward.1} parent=0 // pred_region
    _
  $region5: #{mycnn_forward.1} parent=0 // pred_fallthru
    _
  // Predicated region
  $region6: #{mycnn_forward.1} parent=0 // pred_check
    _
  $region7: #{mycnn_forward.1} parent=0 // pred_check_branch
    %13 = sbr.rel (0) target = $region9
  $region8: #{mycnn_forward.1} parent=0 // pred_region
    _
  $region9: #{mycnn_forward.1} parent=0 // pred_fallthru
    _
  // Predicated region
  $region10: #{mycnn_forward.1} parent=0 // pred_check
    _
  $region11: #{mycnn_forward.1} parent=0 // pred_check_branch
    %15 = sbr.rel (0) target = $region13
  $region12: #{mycnn_forward.1} parent=0 // pred_region
    _
  $region13: #{mycnn_forward.1} parent=0 // pred_fallthru
    _
  // Predicated region
  $region14: #{mycnn_forward.1} parent=0 // pred_check
    _
  $region15: #{mycnn_forward.1} parent=0 // pred_check_branch
    %17 = sbr.rel (0) target = $region17
  $region16: #{mycnn_forward.1} parent=0 // pred_region
    _
  $region17: #{mycnn_forward.1} parent=0 // pred_fallthru
    _
  // Predicated region
  $region18: #{mycnn_forward.1} parent=0 // pred_check
    _
  $region19: #{mycnn_forward.1} parent=0 // pred_check_branch
    %19 = sbr.rel (0) target = $region21
  $region20: #{mycnn_forward.1} parent=0 // pred_region
    _
  $region21: #{mycnn_forward.1} parent=0 // pred_fallthru
    _
  %v21 = vld [vmem:[%s0] sm:$0xf]
  %v22 = vld [vmem:[%s0 + $0x4] sm:$0xf]
  %v23 = vld [vmem:[%s0 + $0x8] sm:$0xf]
  %v24 = vld [vmem:[%s0 + $0xc] sm:$0xf]
  %v29 = vunpack.c.l.b16 %v21
  %v30 = vunpack.c.l.b16 %v22
  %v31 = vunpack.c.l.b16 %v23
  %v32 = vunpack.c.l.b16 %v24
  %v33 = vpack.c.b16 %v30, %v29
  %v34 = vpack.c.b16 %v32, %v31
  %v35 = vld [vmem:[%s1] sm:$0xf]
  %v36 = vld [vmem:[%s1 + $0x4] sm:$0xf]
  %v37 = vld [vmem:[%s1 + $0x8] sm:$0xf]
  %v38 = vld [vmem:[%s1 + $0xc] sm:$0xf]
  %s39 = scalar_lea.vmem %s1, 16
  %v40 = vld [vmem:[%s39] sm:$0xf]
  %v41 = vld [vmem:[%s39 + $0x4] sm:$0xf]
  %v42 = vld [vmem:[%s39 + $0x8] sm:$0xf]
  %v43 = vld [vmem:[%s39 + $0xc] sm:$0xf]
  %vm44 = vsmask.f32 7424
  %v46 = vshrl.u32 %v33, 16
  %v48 = vshll.u32 %v33, 16
  %v50 = vrot.slane %v48, 1
  %v51 = vor.u32 %v46, %v50
  %v53 = vshll.u32 %v34, 16
  %v55 = vrot.slane %v53, 1
  %v56 = vsel %vm44, %v51, %v55
  %v57 = vshrl.u32 %v34, 16
  %v59 = vor.u32 %v57, %v55
  %v61 = vshll.u32 0, 16
  %v63 = vrot.slane %v61, 1
  %v64 = vsel %vm44, %v59, %v63
  %v69 = vunpack.c.l.b16 %v40
  %v70 = vunpack.c.l.b16 %v41
  %v71 = vunpack.c.l.b16 %v42
  %v72 = vunpack.c.l.b16 %v43
  %v73 = vpack.c.b16 %v70, %v69
  %v74 = vpack.c.b16 %v72, %v71
  %vm77 = vcmask 261120
  %v79 = vsel %vm77, %v56, 0
  %v82 = vsel %vm77, %v64, 0
  %84 = vmatprep.subr.bf16.mxu0 0
  %85 = vmatpush1.bf16.msra.mxu0 0
  %86 = vmatprep.subr.bf16.mxu0 0
  %87 = vmatpush1.bf16.msra.mxu0 0
  %88 = vmatprep.subr.bf16.mxu0 0
  %89 = vmatpush1.bf16.msra.mxu0 0
  %90 = vmatprep.subr.bf16.mxu0 0
  %91 = vmatpush1.bf16.msra.mxu0 0
  %92 = vmatprep.subr.bf16.mxu0 0
  %93 = vmatpush1.bf16.msra.mxu0 0
  %94 = vmatprep.subr.bf16.mxu0 0
  %95 = vmatpush1.bf16.msra.mxu0 0
  %96 = vmatprep.subr.bf16.mxu0 0
  %97 = vmatpush1.bf16.msra.mxu0 %v74
  %98 = vmatprep.subr.bf16.mxu0 0
  %99 = vmatpush1.bf16.msra.mxu0 %v73
  %100 = vmatprep.subr.bf16.mxu0 0
  %101 = vmatpush2.bf16.msra.mxu0 0
  %102 = vmatprep.subr.bf16.mxu0 0
  %103 = vmatpush2.bf16.msra.mxu0 0
  %104 = vmatprep.subr.bf16.mxu0 0
  %105 = vmatpush2.bf16.msra.mxu0 0
  %106 = vmatprep.subr.bf16.mxu0 0
  %107 = vmatpush2.bf16.msra.mxu0 0
  %108 = vmatprep.subr.bf16.mxu0 0
  %109 = vmatpush2.bf16.msra.mxu0 0
  %110 = vmatprep.subr.bf16.mxu0 0
  %111 = vmatpush2.bf16.msra.mxu0 0
  %112 = vmatprep.subr.bf16.mxu0 0
  %113 = vmatpush2.bf16.msra.mxu0 0
  %114 = vmatprep.subr.bf16.mxu0 0
  %115 = vmatpush2.bf16.msra.mxu0 0
  %116 = vmatprep.mubr.bf16.mxu0 0
  %117 = vmatmul.mubr.bf16.gmra.mxu0 %v79
  %v118 = vpop.f32.mrf.mxu0
  %v119 = vadd.f32 0.0, %v118
  %v120 = vpop.f32.mrf.mxu0
  %v121 = vpop.f32.mrf.mxu0
  %v122 = vadd.f32 0.0, %v121
  %v123 = vpop.f32.mrf.mxu0
  %124 = vmatprep.mubr.bf16.mxu0 0
  %125 = vmatmul.mubr.bf16.gmra.mxu0 %v82
  %v126 = vpop.f32.mrf.mxu0
  %v127 = vadd.f32 0.0, %v126
  %v128 = vpop.f32.mrf.mxu0
  %v129 = vpop.f32.mrf.mxu0
  %v130 = vadd.f32 0.0, %v129
  %v131 = vpop.f32.mrf.mxu0
  %132 = vdwg.mxu0
  %v137 = vunpack.c.l.b16 %v35
  %v138 = vunpack.c.l.b16 %v36
  %v139 = vunpack.c.l.b16 %v37
  %v140 = vunpack.c.l.b16 %v38
  %v141 = vpack.c.b16 %v138, %v137
  %v142 = vpack.c.b16 %v140, %v139
  %v145 = vsel %vm77, %v33, 0
  %v147 = vsel %vm77, %v34, 0
  %149 = vmatprep.subr.bf16.mxu0 0
  %150 = vmatpush1.bf16.msra.mxu0 0
  %151 = vmatprep.subr.bf16.mxu0 0
  %152 = vmatpush1.bf16.msra.mxu0 0
  %153 = vmatprep.subr.bf16.mxu0 0
  %154 = vmatpush1.bf16.msra.mxu0 0
  %155 = vmatprep.subr.bf16.mxu0 0
  %156 = vmatpush1.bf16.msra.mxu0 0
  %157 = vmatprep.subr.bf16.mxu0 0
  %158 = vmatpush1.bf16.msra.mxu0 0
  %159 = vmatprep.subr.bf16.mxu0 0
  %160 = vmatpush1.bf16.msra.mxu0 0
  %161 = vmatprep.subr.bf16.mxu0 0
  %162 = vmatpush1.bf16.msra.mxu0 %v142
  %163 = vmatprep.subr.bf16.mxu0 0
  %164 = vmatpush1.bf16.msra.mxu0 %v141
  %165 = vmatprep.subr.bf16.mxu0 0
  %166 = vmatpush2.bf16.msra.mxu0 0
  %167 = vmatprep.subr.bf16.mxu0 0
  %168 = vmatpush2.bf16.msra.mxu0 0
  %169 = vmatprep.subr.bf16.mxu0 0
  %170 = vmatpush2.bf16.msra.mxu0 0
  %171 = vmatprep.subr.bf16.mxu0 0
  %172 = vmatpush2.bf16.msra.mxu0 0
  %173 = vmatprep.subr.bf16.mxu0 0
  %174 = vmatpush2.bf16.msra.mxu0 0
  %175 = vmatprep.subr.bf16.mxu0 0
  %176 = vmatpush2.bf16.msra.mxu0 0
  %177 = vmatprep.subr.bf16.mxu0 0
  %178 = vmatpush2.bf16.msra.mxu0 0
  %179 = vmatprep.subr.bf16.mxu0 0
  %180 = vmatpush2.bf16.msra.mxu0 0
  %181 = vmatprep.mubr.bf16.mxu0 0
  %182 = vmatmul.mubr.bf16.gmra.mxu0 %v145
  %v183 = vpop.f32.mrf.mxu0
  %v184 = vadd.f32 %v119, %v183
  %v185 = vpop.f32.mrf.mxu0
  %v186 = vpop.f32.mrf.mxu0
  %v187 = vadd.f32 %v122, %v186
  %v188 = vpop.f32.mrf.mxu0
  %189 = vmatprep.mubr.bf16.mxu0 0
  %190 = vmatmul.mubr.bf16.gmra.mxu0 %v147
  %v191 = vpop.f32.mrf.mxu0
  %v192 = vadd.f32 %v127, %v191
  %v193 = vpop.f32.mrf.mxu0
  %v194 = vpop.f32.mrf.mxu0
  %v195 = vadd.f32 %v130, %v194
  %v196 = vpop.f32.mrf.mxu0
  %197 = vdwg.mxu0
  %s198 = scalar_lea.vmem %s1, 32
  %v199 = vld [vmem:[%s198] sm:$0xf]
  %v200 = vld [vmem:[%s198 + $0x4] sm:$0xf]
  %v201 = vld [vmem:[%s198 + $0x8] sm:$0xf]
  %v202 = vld [vmem:[%s198 + $0xc] sm:$0xf]
  %vm204 = vcmask 1046528
  %v205 = vrot.slane %v33, 1
  %v206 = vrot.slane %v34, 1
  %v207 = vsel %vm204, %v205, %v206
  %v208 = vrot.slane 0, 1
  %v209 = vsel %vm204, %v206, %v208
  %v214 = vunpack.c.l.b16 %v199
  %v215 = vunpack.c.l.b16 %v200
  %v216 = vunpack.c.l.b16 %v201
  %v217 = vunpack.c.l.b16 %v202
  %v218 = vpack.c.b16 %v215, %v214
  %v219 = vpack.c.b16 %v217, %v216
  %v223 = vsel %vm77, %v207, 0
  %v226 = vsel %vm77, %v209, 0
  %228 = vmatprep.subr.bf16.mxu0 0
  %229 = vmatpush1.bf16.msra.mxu0 0
  %230 = vmatprep.subr.bf16.mxu0 0
  %231 = vmatpush1.bf16.msra.mxu0 0
  %232 = vmatprep.subr.bf16.mxu0 0
  %233 = vmatpush1.bf16.msra.mxu0 0
  %234 = vmatprep.subr.bf16.mxu0 0
  %235 = vmatpush1.bf16.msra.mxu0 0
  %236 = vmatprep.subr.bf16.mxu0 0
  %237 = vmatpush1.bf16.msra.mxu0 0
  %238 = vmatprep.subr.bf16.mxu0 0
  %239 = vmatpush1.bf16.msra.mxu0 0
  %240 = vmatprep.subr.bf16.mxu0 0
  %241 = vmatpush1.bf16.msra.mxu0 %v219
  %242 = vmatprep.subr.bf16.mxu0 0
  %243 = vmatpush1.bf16.msra.mxu0 %v218
  %244 = vmatprep.subr.bf16.mxu0 0
  %245 = vmatpush2.bf16.msra.mxu0 0
  %246 = vmatprep.subr.bf16.mxu0 0
  %247 = vmatpush2.bf16.msra.mxu0 0
  %248 = vmatprep.subr.bf16.mxu0 0
  %249 = vmatpush2.bf16.msra.mxu0 0
  %250 = vmatprep.subr.bf16.mxu0 0
  %251 = vmatpush2.bf16.msra.mxu0 0
  %252 = vmatprep.subr.bf16.mxu0 0
  %253 = vmatpush2.bf16.msra.mxu0 0
  %254 = vmatprep.subr.bf16.mxu0 0
  %255 = vmatpush2.bf16.msra.mxu0 0
  %256 = vmatprep.subr.bf16.mxu0 0
  %257 = vmatpush2.bf16.msra.mxu0 0
  %258 = vmatprep.subr.bf16.mxu0 0
  %259 = vmatpush2.bf16.msra.mxu0 0
  %260 = vmatprep.mubr.bf16.mxu0 0
  %261 = vmatmul.mubr.bf16.gmra.mxu0 %v223
  %v262 = vpop.f32.mrf.mxu0
  %v263 = vadd.f32 0.0, %v262
  %v264 = vpop.f32.mrf.mxu0
  %v265 = vpop.f32.mrf.mxu0
  %v266 = vadd.f32 0.0, %v265
  %v267 = vpop.f32.mrf.mxu0
  %268 = vmatprep.mubr.bf16.mxu0 0
  %269 = vmatmul.mubr.bf16.gmra.mxu0 %v226
  %v270 = vpop.f32.mrf.mxu0
  %v271 = vadd.f32 0.0, %v270
  %v272 = vpop.f32.mrf.mxu0
  %v273 = vpop.f32.mrf.mxu0
  %v274 = vadd.f32 0.0, %v273
  %v275 = vpop.f32.mrf.mxu0
  %276 = vdwg.mxu0
  %v277 = vadd.f32 %v184, %v263
  %v278 = vadd.f32 %v187, %v266
  %v279 = vadd.f32 %v192, %v271
  %v280 = vadd.f32 %v195, %v274
  %s281 = scalar_lea.vmem %s1, 48
  %v282 = vld [vmem:[%s281] sm:$0xf]
  %v283 = vld [vmem:[%s281 + $0x4] sm:$0xf]
  %v284 = vld [vmem:[%s281 + $0x8] sm:$0xf]
  %v285 = vld [vmem:[%s281 + $0xc] sm:$0xf]
  %vm286 = vsmask.f32 6400
  %v287 = vrot.slane %v46, 1
  %v288 = vrot.slane %v48, 2
  %v289 = vor.u32 %v287, %v288
  %v290 = vrot.slane %v57, 1
  %v291 = vrot.slane %v53, 2
  %v292 = vor.u32 %v290, %v291
  %v293 = vsel %vm286, %v289, %v292
  %v294 = vshrl.u32 0, 16
  %v296 = vrot.slane %v294, 1
  %v297 = vrot.slane %v61, 2
  %v298 = vor.u32 %v296, %v297
  %v299 = vsel %vm286, %v292, %v298
  %v304 = vunpack.c.l.b16 %v282
  %v305 = vunpack.c.l.b16 %v283
  %v306 = vunpack.c.l.b16 %v284
  %v307 = vunpack.c.l.b16 %v285
  %v308 = vpack.c.b16 %v305, %v304
  %v309 = vpack.c.b16 %v307, %v306
  %v313 = vsel %vm77, %v293, 0
  %v316 = vsel %vm77, %v299, 0
  %318 = vmatprep.subr.bf16.mxu0 0
  %319 = vmatpush1.bf16.msra.mxu0 0
  %320 = vmatprep.subr.bf16.mxu0 0
  %321 = vmatpush1.bf16.msra.mxu0 0
  %322 = vmatprep.subr.bf16.mxu0 0
  %323 = vmatpush1.bf16.msra.mxu0 0
  %324 = vmatprep.subr.bf16.mxu0 0
  %325 = vmatpush1.bf16.msra.mxu0 0
  %326 = vmatprep.subr.bf16.mxu0 0
  %327 = vmatpush1.bf16.msra.mxu0 0
  %328 = vmatprep.subr.bf16.mxu0 0
  %329 = vmatpush1.bf16.msra.mxu0 0
  %330 = vmatprep.subr.bf16.mxu0 0
  %331 = vmatpush1.bf16.msra.mxu0 %v309
  %332 = vmatprep.subr.bf16.mxu0 0
  %333 = vmatpush1.bf16.msra.mxu0 %v308
  %334 = vmatprep.subr.bf16.mxu0 0
  %335 = vmatpush2.bf16.msra.mxu0 0
  %336 = vmatprep.subr.bf16.mxu0 0
  %337 = vmatpush2.bf16.msra.mxu0 0
  %338 = vmatprep.subr.bf16.mxu0 0
  %339 = vmatpush2.bf16.msra.mxu0 0
  %340 = vmatprep.subr.bf16.mxu0 0
  %341 = vmatpush2.bf16.msra.mxu0 0
  %342 = vmatprep.subr.bf16.mxu0 0
  %343 = vmatpush2.bf16.msra.mxu0 0
  %344 = vmatprep.subr.bf16.mxu0 0
  %345 = vmatpush2.bf16.msra.mxu0 0
  %346 = vmatprep.subr.bf16.mxu0 0
  %347 = vmatpush2.bf16.msra.mxu0 0
  %348 = vmatprep.subr.bf16.mxu0 0
  %349 = vmatpush2.bf16.msra.mxu0 0
  %350 = vmatprep.mubr.bf16.mxu0 0
  %351 = vmatmul.mubr.bf16.gmra.mxu0 %v313
  %v352 = vpop.f32.mrf.mxu0
  %v353 = vadd.f32 0.0, %v352
  %v354 = vpop.f32.mrf.mxu0
  %v355 = vpop.f32.mrf.mxu0
  %v356 = vadd.f32 0.0, %v355
  %v357 = vpop.f32.mrf.mxu0
  %358 = vmatprep.mubr.bf16.mxu0 0
  %359 = vmatmul.mubr.bf16.gmra.mxu0 %v316
  %v360 = vpop.f32.mrf.mxu0
  %v361 = vadd.f32 0.0, %v360
  %v362 = vpop.f32.mrf.mxu0
  %v363 = vpop.f32.mrf.mxu0
  %v364 = vadd.f32 0.0, %v363
  %v365 = vpop.f32.mrf.mxu0
  %366 = vdwg.mxu0
  %v367 = vadd.f32 %v277, %v353
  %v368 = vadd.f32 %v278, %v356
  %v369 = vadd.f32 %v279, %v361
  %v370 = vadd.f32 %v280, %v364
  %v371 = vlaneseq
  %v372 = vshrl.u32 %v371, 7
  %v373 = vadd.s32 %v372, 8
  %vm374 = vcmask 64512
  %v375 = vsel %vm374, 14, 13
  %vm376 = vcmask 130048
  %v377 = vsel %vm376, %v375, 12
  %vm378 = vcmp.le.s32.totalorder %v372, %v377
  %vm379 = vcmp.le.s32.totalorder %v373, %v377
  %v380 = vsel %vm378, 1, 0
  %v381 = vsel %vm379, 1, 0
  %vm382 = vcmp.eq.s32.totalorder %v380, 1
  %vm383 = vcmp.eq.s32.totalorder %v381, 1
  %v384 = vsel %vm382, %v367, -inf
  %v385 = vsel %vm383, %v368, -inf
  %v386 = vsel %vm382, %v369, -inf
  %v387 = vsel %vm383, %v370, -inf
  %vm388 = vcmask 195584
  %v389 = vsel %vm388, %v384, -inf
  %v390 = vsel %vm388, %v385, -inf
  %v391 = vmax.f32 %v389, %v390
  %v392 = vrot.slane %v391, 4
  %v393 = vmax.f32 %v391, %v392
  %v394 = vrot.slane %v393, 2
  %v395 = vmax.f32 %v393, %v394
  %v396 = vrot.slane %v395, 1
  %v397 = vmax.f32 %v395, %v396
  %v398 = vsel %vm388, %v386, -inf
  %v399 = vsel %vm388, %v387, -inf
  %v400 = vmax.f32 %v398, %v399
  %v401 = vrot.slane %v400, 4
  %v402 = vmax.f32 %v400, %v401
  %v403 = vrot.slane %v402, 2
  %v404 = vmax.f32 %v402, %v403
  %v405 = vrot.slane %v404, 1
  %v406 = vmax.f32 %v404, %v405
  %v407 = vld [vmem:[%s2] sm:$0x1]
  %v409 = vlaneseq
  %v410 = vshrl.u32 %v409, 7
  %v411 = vsub.s32 0, %v410
  %v412 = vrot.slane %v407, %v411
  %v414 = vadd.f32 %v397, %v412
  %v415 = vadd.f32 %v406, %v412
  %v416 = vmax.f32 %v414, 0.0
  %v417 = vmax.f32 %v415, 0.0
  %v418 = vpack.c.bf16 %v416, %v416
  %v419 = vpack.c.bf16 %v417, %v417
  %v420 = vld [vmem:[%s3] sm:$0xf]
  %v421 = vld [vmem:[%s3 + $0x4] sm:$0xf]
  %v422 = vld [vmem:[%s3 + $0x8] sm:$0xf]
  %v423 = vld [vmem:[%s4] sm:$0x1]
  %v425 = vlaneseq
  %v426 = vshrl.u32 %v425, 7
  %v427 = vsub.s32 0, %v426
  %v428 = vrot.slane %v423, %v427
  %v432 = vunpack.c.l.b16 %v418
  %v433 = vunpack.c.l.b16 %v419
  %v434 = vrot.slane %v433, 7
  %vm435 = vcmask 1041409
  %v436 = vsel %vm435, %v434, %v432
  %v437 = vpack.c.b16 %v436, %v436
  %v441 = vunpack.c.l.b16 %v420
  %v442 = vunpack.c.l.b16 %v421
  %v443 = vunpack.c.l.b16 %v422
  %v444 = vpack.c.b16 %v442, %v441
  %v445 = vpack.c.b16 %v443, %v443
  %v448 = vsel %vm388, %v437, 0
  %vm450 = vcmask 1043456
  %v452 = vsel %vm450, %v445, 0
  %454 = vmatprep.subr.bf16.mxu0 0
  %455 = vmatpush1.bf16.msra.mxu0 0
  %456 = vmatprep.subr.bf16.mxu0 0
  %457 = vmatpush1.bf16.msra.mxu0 0
  %458 = vmatprep.subr.bf16.mxu0 0
  %459 = vmatpush1.bf16.msra.mxu0 0
  %460 = vmatprep.subr.bf16.mxu0 0
  %461 = vmatpush1.bf16.msra.mxu0 0
  %462 = vmatprep.subr.bf16.mxu0 0
  %463 = vmatpush1.bf16.msra.mxu0 0
  %464 = vmatprep.subr.bf16.mxu0 0
  %465 = vmatpush1.bf16.msra.mxu0 0
  %466 = vmatprep.subr.bf16.mxu0 0
  %467 = vmatpush1.bf16.msra.mxu0 %v452
  %468 = vmatprep.subr.bf16.mxu0 0
  %469 = vmatpush1.bf16.msra.mxu0 %v444
  %470 = vmatprep.subr.bf16.mxu0 0
  %471 = vmatpush2.bf16.msra.mxu0 0
  %472 = vmatprep.subr.bf16.mxu0 0
  %473 = vmatpush2.bf16.msra.mxu0 0
  %474 = vmatprep.subr.bf16.mxu0 0
  %475 = vmatpush2.bf16.msra.mxu0 0
  %476 = vmatprep.subr.bf16.mxu0 0
  %477 = vmatpush2.bf16.msra.mxu0 0
  %478 = vmatprep.subr.bf16.mxu0 0
  %479 = vmatpush2.bf16.msra.mxu0 0
  %480 = vmatprep.subr.bf16.mxu0 0
  %481 = vmatpush2.bf16.msra.mxu0 0
  %482 = vmatprep.subr.bf16.mxu0 0
  %483 = vmatpush2.bf16.msra.mxu0 0
  %484 = vmatprep.subr.bf16.mxu0 0
  %485 = vmatpush2.bf16.msra.mxu0 0
  %486 = vmatprep.mubr.bf16.mxu0 0
  %487 = vmatmul.mubr.bf16.gmra.mxu0 %v448
  %v488 = vpop.f32.mrf.mxu0
  %v489 = vadd.f32 %v428, %v488
  %v490 = vpop.f32.mrf.mxu0
  %v491 = vpop.f32.mrf.mxu0
  %v492 = vpop.f32.mrf.mxu0
  %493 = vdwg.mxu0
  %vm494 = vcmask 25600
  %v495 = vsel %vm494, %v489, -inf
  %496 = vmax.xlane.f32.xlu0 %v495
  %v497 = vpop.xlane.xlu0 %496
  %v498 = vsub.f32 %v489, %v497
  %v499 = vmul.f32 %v498, 1.442695
  %v500 = vpow.pop %v499
  %v501 = vsel %vm494, %v500, 0.0
  %502 = vadd.xlane.f32.xlu0 %v501
  %v503 = vpop.xlane.xlu0 %502
  %v504 = vrcp.pop %v503
  %v505 = vmul.f32 %v500, %v504
  %vm506 = vcmask 74784
  %v507 = vsel %vm506, %v489, -inf
  %508 = vmax.xlane.f32.xlu0 %v507
  %v509 = vpop.xlane.xlu0 %508
  %v510 = vsub.f32 %v489, %v509
  %v511 = vmul.f32 %v510, 1.442695
  %v512 = vpow.pop %v511
  %514 = vrot.lane.b32.xlu0 %v512, 124
  %v515 = vpop.permute.xlu0 %514
  %vm517 = vcmask 41984
  %v518 = vsel %vm517, %v515, 0.0
  %519 = vadd.xlane.f32.xlu0 %v518
  %v520 = vpop.xlane.xlu0 %519
  %v521 = vrcp.pop %v520
  %v522 = vmul.f32 %v512, %v521
  %vm523 = vcmask 31744
  %v524 = vsel %vm523, %v505, %v522
  %vm525 = vcmask 74752
  %526 = vst.msk [vmem:[%s5] sm:$0x3] %vm525, %v524
  // Predicated region
  $region22: #{mycnn_forward.1} parent=0 // pred_check
    _
  $region23: #{mycnn_forward.1} parent=0 // pred_check_branch
    %528 = sbr.rel (0) target = $region25
  $region24: #{mycnn_forward.1} parent=0 // pred_region
    _
  $region25: #{mycnn_forward.1} parent=0 // pred_fallthru
    _
  // Predicated region
  $region26: #{mycnn_forward.1} parent=0 // pred_check
    _
  $region27: #{mycnn_forward.1} parent=0 // pred_check_branch
    %530 = sbr.rel (0) target = $region29
  $region28: #{mycnn_forward.1} parent=0 // pred_region
    _
  $region29: #{mycnn_forward.1} parent=0 // pred_fallthru
    _

</llo_original>
